<compile_context>
chip_gen: v7x
topology: tpu7x:2x2x1
jax: 0.10.0
libtpu: 0.0.40
codegen_flags: <defaults>
</compile_context>

<pallas_src>
import functools

import numpy as np
import jax
import jax.numpy as jnp
from jax.experimental import pallas as pl
from jax.experimental.pallas import tpu as pltpu

PYRAMID_LEVELS = (1, 2, 4, 8)
LN_EPS = 1e-5  # torch.nn.LayerNorm default eps


# ----------------------------------------------------------------------------
# Static (trace-time) pooling-weight construction + one-time weight fusion
# ----------------------------------------------------------------------------
def _pool_weight_rows(seq_len, levels):
    """Per-timestep weights implementing 'mean over segments of segment means'.

    Segment bounds match F.adaptive_avg_pool1d (floor/ceil), which coincides
    with the view().mean() branch whenever seq_len % level == 0.  Identical
    rows across levels are deduplicated.  Returns (rows [G,S] f32, row_of_level).
    """
    rows, row_of, seen = [], [], {}
    for level in levels:
        w = np.zeros(seq_len, dtype=np.float64)
        for j in range(level):
            s0 = (j * seq_len) // level
            s1 = -((-(j + 1) * seq_len) // level)
            w[s0:s1] += 1.0 / (s1 - s0)
        w /= level
        key = w.astype(np.float32).tobytes()
        if key not in seen:
            seen[key] = len(rows)
            rows.append(w.astype(np.float32))
        row_of.append(seen[key])
    return np.stack(rows), row_of


def fuse_params(params, seq_len, levels=PYRAMID_LEVELS):
    """Fold the per-level projections into the fusion Linear (run once, outside the kernel)."""
    wp, bp, wf, bf = params["wp"], params["bp"], params["wf"], params["bf"]
    n_levels, input_dim, dp = wp.shape
    wf3 = wf.reshape(n_levels, dp, input_dim)               # per-level slice of fusion weight
    weff_l = jnp.einsum("ldp,lpe->lde", wp, wf3)            # [L, D, D]
    beff = bf + jnp.einsum("lp,lpe->e", bp, wf3)[None, :]   # [1, D]

    rows, row_of = _pool_weight_rows(seq_len, levels)
    n_groups = rows.shape[0]
    weff_g = jnp.zeros((n_groups, input_dim, input_dim), weff_l.dtype)
    for lvl, grp in enumerate(row_of):                      # group-sum by unique pooling row
        weff_g = weff_g.at[grp].add(weff_l[lvl])

    return {
        "wpool": jnp.asarray(rows)[:, :, None],             # [G, S, 1]
        "weff": weff_g.reshape(n_groups * input_dim, input_dim),   # [G*D, D] -> one fused dot
        "beff": beff,                                       # [1, D]
        "gamma": params["gamma"],                           # [1, D]
        "beta": params["beta"],                             # [1, D]
    }


# ----------------------------------------------------------------------------
# Tile / VMEM sizing helpers
# ----------------------------------------------------------------------------
def _vmem_budget_bytes():
    """~70% of physical per-core VMEM (128 MiB v5e/v6e, 64 MiB v7x); conservative fallback."""
    cap = 64 << 20
    try:
        info = pltpu.get_tpu_info()
        cap = int(getattr(info, "vmem_capacity_bytes", cap) or cap)
    except Exception:
        pass
    return int(cap * 0.70)


def _largest_aligned_divisor(total, cap, align=8):
    """Largest divisor of `total` that is <= cap and a multiple of `align`
    (falls back to `total`, i.e. no tiling, which is always block-legal)."""
    cap = max(min(cap, total), 1)
    if total <= cap:
        return total
    for t in range(cap, 0, -1):
        if total % t == 0 and t % align == 0:
            return t
    for t in range(cap + 1, total):
        if total % t == 0 and t % align == 0:
            return t
    return total


def _choose_tiles(B, S, D, G, itemsize, vmem_budget):
    # Batch tile: exact divisor of B (no padded LN rows), sublane-aligned, <= 256.
    tb = _largest_aligned_divisor(B, cap=256, align=8)
    # v7x has 2 TensorCores: give the "parallel" batch axis >= 2 steps when the
    # (8,·) alignment allows it (costs ~0.35 us/step on 1-TC chips — negligible).
    if tb == B and B % 16 == 0:
        tb = B // 2

    # Seq tile: size the double-buffered x chunk to fill the remaining budget.
    resident = (2 * G * D * D * 4        # fused weights (worst case double buffered)
                + tb * G * D * 4         # accumulator scratch
                + 2 * tb * D * 4         # output slab
                + 8 * D * 4)             # bias / gamma / beta + slack
    avail = max(vmem_budget - resident, 2 * tb * 8 * D * itemsize)
    ts_cap = max(int(avail // (2 * tb * D * itemsize)), 8)
    ts_cap = min(ts_cap, 1024, S)
    ts = _largest_aligned_divisor(S, cap=ts_cap, align=8)
    return tb, ts


def _resident_spec(block_shape, index_map):
    """Constant-index-map operand: single VMEM buffer (no double buffering)."""
    try:
        return pl.BlockSpec(block_shape, index_map, pipeline_mode=pl.Buffered(1))
    except Exception:                                       # older Pallas: no pipeline_mode kwarg
        return pl.BlockSpec(block_shape, index_map)


# ----------------------------------------------------------------------------
# Kernel
# ----------------------------------------------------------------------------
def tpp_kernel(x_ref, wpool_ref, weff_ref, beff_ref, gamma_ref, beta_ref,
               o_ref, acc_ref, *, n_groups, feat_dim):
    s = pl.program_id(1)

    @pl.when(s == 0)
    def _init():
        acc_ref[...] = jnp.zeros_like(acc_ref)

    # Weighted partial time-reduction of this (TB, TS, D) chunk, accumulated in f32.
    x = x_ref[...]                                          # stays in input dtype (bf16-friendly)
    for g in range(n_groups):                               # static unroll; G is 1 (or 2) in practice
        w = wpool_ref[g].astype(x.dtype)                    # [TS, 1]
        partial = jnp.sum(x * w[None, :, :], axis=1, dtype=jnp.float32)   # [TB, D]
        acc_ref[:, g * feat_dim:(g + 1) * feat_dim] = (
            acc_ref[:, g * feat_dim:(g + 1) * feat_dim] + partial)

    # Fused projection + bias + LayerNorm + ReLU only on the last S step.
    @pl.when(s == pl.num_programs(1) - 1)
    def _finalize():
        fused = jnp.dot(acc_ref[...], weff_ref[...],
                        preferred_element_type=jnp.float32) + beff_ref[...]
        mu = jnp.mean(fused, axis=-1, keepdims=True)
        var = jnp.mean(jnp.square(fused - mu), axis=-1, keepdims=True)
        normed = (fused - mu) * jax.lax.rsqrt(var + LN_EPS)
        out = jnp.maximum(normed * gamma_ref[...] + beta_ref[...], 0.0)
        o_ref[...] = out.astype(o_ref.dtype)


def temporal_pyramid_pooling(x, fused_params):
    B, S, D = x.shape
    wpool, weff = fused_params["wpool"], fused_params["weff"]
    G = wpool.shape[0]
    itemsize = jnp.dtype(x.dtype).itemsize

    budget = _vmem_budget_bytes()
    TB, TS = _choose_tiles(B, S, D, G, itemsize, budget)
    grid = (pl.cdiv(B, TB), pl.cdiv(S, TS))

    kernel = functools.partial(tpp_kernel, n_groups=G, feat_dim=D)
    return pl.pallas_call(
        kernel,
        out_shape=jax.ShapeDtypeStruct((B, D), x.dtype),
        grid_spec=pltpu.PrefetchScalarGridSpec(
            num_scalar_prefetch=0,
            grid=grid,
            in_specs=[
                pl.BlockSpec((TB, TS, D), lambda b, s: (b, s, 0)),     # x: streamed chunks
                pl.BlockSpec((G, TS, 1), lambda b, s: (0, s, 0)),      # pooling rows (tiny)
                _resident_spec((G * D, D), lambda b, s: (0, 0)),       # fused weights: resident, 1 buffer
                _resident_spec((1, D), lambda b, s: (0, 0)),           # fused bias
                _resident_spec((1, D), lambda b, s: (0, 0)),           # LN gamma
                _resident_spec((1, D), lambda b, s: (0, 0)),           # LN beta
            ],
            out_specs=pl.BlockSpec((TB, D), lambda b, s: (b, 0)),      # lane-dense output slab
            scratch_shapes=[pltpu.VMEM((TB, G * D), jnp.float32)],     # time-reduction accumulator
        ),
        compiler_params=pltpu.CompilerParams(
            dimension_semantics=("parallel", "arbitrary"),             # batch parallel, S reduction
            vmem_limit_bytes=int(budget),                              # don't let scoped default cap tiles
        ),
    )(x, wpool, weff, fused_params["beff"],
      fused_params["gamma"], fused_params["beta"])


# ----------------------------------------------------------------------------
# Params + pure-JAX reference (mirrors the PyTorch module exactly)
# ----------------------------------------------------------------------------
def init_params(key, input_dim, levels=PYRAMID_LEVELS):
    n = len(levels)
    dp = input_dim // n
    k = jax.random.split(key, 4)
    lim = 1.0 / (input_dim ** 0.5)
    wp = jax.random.uniform(k[0], (n, input_dim, dp), jnp.float32, -lim, lim)
    bp = jax.random.uniform(k[1], (n, dp), jnp.float32, -lim, lim)
    wf = jax.random.uniform(k[2], (input_dim, input_dim), jnp.float32, -lim, lim)
    bf = jax.random.uniform(k[3], (1, input_dim), jnp.float32, -lim, lim)
    gamma = jnp.ones((1, input_dim), jnp.float32)
    beta = jnp.zeros((1, input_dim), jnp.float32)
    return {"wp": wp, "bp": bp, "wf": wf, "bf": bf, "gamma": gamma, "beta": beta}


def tpp_reference(x, params, levels=PYRAMID_LEVELS):
    B, S, D = x.shape
    feats = []
    for i, level in enumerate(levels):
        segs = []
        for j in range(level):
            s0 = (j * S) // level
            s1 = -((-(j + 1) * S) // level)
            segs.append(jnp.mean(x[:, s0:s1, :], axis=1))
        pooled = jnp.stack(segs, axis=1)                    # [B, level, D]
        proj = pooled @ params["wp"][i] + params["bp"][i]   # [B, level, dp]
        feats.append(jnp.mean(proj, axis=1))
    comb = jnp.concatenate(feats, axis=-1)                  # [B, D]
    fused = comb @ params["wf"] + params["bf"]
    mu = fused.mean(-1, keepdims=True)
    var = jnp.mean((fused - mu) ** 2, axis=-1, keepdims=True)
    normed = (fused - mu) / jnp.sqrt(var + LN_EPS)
    return jnp.maximum(normed * params["gamma"] + params["beta"], 0.0)


if __name__ == "__main__":
    key = jax.random.PRNGKey(0)
    kx1, kx2, kp = jax.random.split(key, 3)

    dim = 128                                   # divisible by len(levels)=4, lane-dense
    params = init_params(kp, dim)

    # Case 1: seq divisible by every level (view().mean() branch) -> G == 1.
    b1, s1 = 8, 8
    x1 = jax.random.normal(kx1, (b1, s1, dim), jnp.float32)
    out1 = jax.block_until_ready(temporal_pyramid_pooling(x1, fuse_params(params, s1)))
    ref1 = jax.block_until_ready(tpp_reference(x1, params))
    assert out1.shape == (b1, dim) and out1.dtype == x1.dtype
    assert jnp.allclose(out1, ref1, atol=1e-3, rtol=1e-3), float(jnp.max(jnp.abs(out1 - ref1)))

    # Case 2: seq NOT divisible by level 8 (adaptive_avg_pool1d branch, G > 1),
    #         batch large enough that the "parallel" grid axis has 2 steps.
    b2, s2 = 16, 12
    x2 = jax.random.normal(kx2, (b2, s2, dim), jnp.float32)
    out2 = jax.block_until_ready(temporal_pyramid_pooling(x2, fuse_params(params, s2)))
    ref2 = jax.block_until_ready(tpp_reference(x2, params))
    assert out2.shape == (b2, dim) and out2.dtype == x2.dtype
    assert jnp.allclose(out2, ref2, atol=1e-3, rtol=1e-3), float(jnp.max(jnp.abs(out2 - ref2)))

    print("KERNEL_OK")
</pallas_src>

<mosaic_0001>
module attributes {stable_mosaic.version = 11 : i64} {
  func.func @tpp_kernel(%arg0: i32, %arg1: i32, %arg2: memref<8x8x128xf32, #tpu.memory_space<vmem>>, %arg3: memref<1x8x1xf32, #tpu.memory_space<vmem>>, %arg4: memref<128x128xf32, #tpu.memory_space<vmem>>, %arg5: memref<1x128xf32, #tpu.memory_space<vmem>>, %arg6: memref<1x128xf32, #tpu.memory_space<vmem>>, %arg7: memref<1x128xf32, #tpu.memory_space<vmem>>, %arg8: memref<8x128xf32, #tpu.memory_space<vmem>>, %arg9: memref<8x128xf32, #tpu.memory_space<vmem>>) attributes {dimension_semantics = [#tpu.dimension_semantics<parallel>, #tpu.dimension_semantics<arbitrary>], iteration_bounds = array<i64: 1, 1>, scalar_prefetch = 0 : i64, scratch_operands = 1 : i64, tpu.core_type = #tpu.core_type<tc>, window_params = [{transform_indices = @transform_0, window_bounds = array<i64: 8, 8, 128>}, {transform_indices = @transform_1, window_bounds = array<i64: 1, 8, 1>}, {pipeline_mode = #tpu.pipeline_mode<synchronous>, transform_indices = @transform_2, window_bounds = array<i64: 128, 128>}, {pipeline_mode = #tpu.pipeline_mode<synchronous>, transform_indices = @transform_3, window_bounds = array<i64: 1, 128>}, {pipeline_mode = #tpu.pipeline_mode<synchronous>, transform_indices = @transform_4, window_bounds = array<i64: 1, 128>}, {pipeline_mode = #tpu.pipeline_mode<synchronous>, transform_indices = @transform_5, window_bounds = array<i64: 1, 128>}, {transform_indices = @transform_6, window_bounds = array<i64: 8, 128>}]} {
    %c0_i32 = arith.constant 0 : i32
    %0 = arith.cmpi eq, %arg1, %c0_i32 : i32
    %1 = arith.extui %0 : i1 to i32
    %c0_i32_0 = arith.constant 0 : i32
    %2 = arith.cmpi ne, %1, %c0_i32_0 : i32
    scf.if %2 {
      %cst_12 = arith.constant 0.000000e+00 : f32
      %16 = vector.broadcast %cst_12 : f32 to vector<8x128xf32>
      %c0_13 = arith.constant 0 : index
      %c0_14 = arith.constant 0 : index
      %17 = vector.load %arg9[%c0_13, %c0_14] : memref<8x128xf32, #tpu.memory_space<vmem>>, vector<8x128xf32>
      tpu.vector_store %arg9[%c0_13, %c0_14], %16 {strides = array<i32>} : memref<8x128xf32, #tpu.memory_space<vmem>>, vector<8x128xf32>,
    } else {
    }
    %c0 = arith.constant 0 : index
    %c0_1 = arith.constant 0 : index
    %c0_2 = arith.constant 0 : index
    %3 = vector.load %arg2[%c0, %c0_1, %c0_2] : memref<8x8x128xf32, #tpu.memory_space<vmem>>, vector<8x8x128xf32>
    %c0_3 = arith.constant 0 : index
    %c0_4 = arith.constant 0 : index
    %c0_5 = arith.constant 0 : index
    %4 = vector.load %arg3[%c0_3, %c0_4, %c0_5] : memref<1x8x1xf32, #tpu.memory_space<vmem>>, vector<1x8x1xf32>
    %5 = vector.shape_cast %4 : vector<1x8x1xf32> to vector<8x1xf32>
    %6 = vector.shape_cast %5 : vector<8x1xf32> to vector<1x8x1xf32>
    %7 = vector.broadcast %6 : vector<1x8x1xf32> to vector<8x8x128xf32>
    %8 = arith.mulf %3, %7 : vector<8x8x128xf32>
    %cst = arith.constant dense<0.000000e+00> : vector<8x128xf32>
    %9 = vector.multi_reduction <add>, %8, %cst [1] : vector<8x8x128xf32> to vector<8x128xf32>
    %c0_6 = arith.constant 0 : index
    %c0_7 = arith.constant 0 : index
    %10 = vector.load %arg9[%c0_6, %c0_7] : memref<8x128xf32, #tpu.memory_space<vmem>>, vector<8x128xf32>
    %11 = arith.addf %10, %9 : vector<8x128xf32>
    %c0_8 = arith.constant 0 : index
    %c0_9 = arith.constant 0 : index
    %12 = vector.load %arg9[%c0_8, %c0_9] : memref<8x128xf32, #tpu.memory_space<vmem>>, vector<8x128xf32>
    tpu.vector_store %arg9[%c0_8, %c0_9], %11 {strides = array<i32>} : memref<8x128xf32, #tpu.memory_space<vmem>>, vector<8x128xf32>,
    %c0_i32_10 = arith.constant 0 : i32
    %13 = arith.cmpi eq, %arg1, %c0_i32_10 : i32
    %14 = arith.extui %13 : i1 to i32
    %c0_i32_11 = arith.constant 0 : i32
    %15 = arith.cmpi ne, %14, %c0_i32_11 : i32
    scf.if %15 {
      %c0_12 = arith.constant 0 : index
      %c0_13 = arith.constant 0 : index
      %16 = vector.load %arg9[%c0_12, %c0_13] : memref<8x128xf32, #tpu.memory_space<vmem>>, vector<8x128xf32>
      %c0_14 = arith.constant 0 : index
      %c0_15 = arith.constant 0 : index
      %17 = vector.load %arg4[%c0_14, %c0_15] : memref<128x128xf32, #tpu.memory_space<vmem>>, vector<128x128xf32>
      %cst_16 = arith.constant dense<0.000000e+00> : vector<8x128xf32>
      %18 = tpu.matmul %16, %17, %cst_16 {dimension_numbers = #tpu.dot_dimension_numbers<[1], [0], [0], [1], [0, 0, 1, 1], [], []>} : vector<8x128xf32>, vector<128x128xf32>, vector<8x128xf32> -> vector<8x128xf32>
      %c0_17 = arith.constant 0 : index
      %c0_18 = arith.constant 0 : index
      %19 = vector.load %arg5[%c0_17, %c0_18] : memref<1x128xf32, #tpu.memory_space<vmem>>, vector<1x128xf32>
      %20 = vector.broadcast %19 : vector<1x128xf32> to vector<8x128xf32>
      %21 = arith.addf %18, %20 : vector<8x128xf32>
      %cst_19 = arith.constant dense<0.000000e+00> : vector<8xf32>
      %22 = vector.multi_reduction <add>, %21, %cst_19 [1] : vector<8x128xf32> to vector<8xf32>
      %23 = vector.shape_cast %22 : vector<8xf32> to vector<8x1xf32>
      %cst_20 = arith.constant 1.280000e+02 : f32
      %24 = vector.broadcast %cst_20 : f32 to vector<8x1xf32>
      %25 = arith.divf %23, %24 : vector<8x1xf32>
      %26 = vector.broadcast %25 : vector<8x1xf32> to vector<8x128xf32>
      %27 = arith.subf %21, %26 : vector<8x128xf32>
      %28 = arith.mulf %27, %27 : vector<8x128xf32>
      %cst_21 = arith.constant dense<0.000000e+00> : vector<8xf32>
      %29 = vector.multi_reduction <add>, %28, %cst_21 [1] : vector<8x128xf32> to vector<8xf32>
      %30 = vector.shape_cast %29 : vector<8xf32> to vector<8x1xf32>
      %cst_22 = arith.constant 1.280000e+02 : f32
      %31 = vector.broadcast %cst_22 : f32 to vector<8x1xf32>
      %32 = arith.divf %30, %31 : vector<8x1xf32>
      %33 = vector.broadcast %25 : vector<8x1xf32> to vector<8x128xf32>
      %34 = arith.subf %21, %33 : vector<8x128xf32>
      %cst_23 = arith.constant 9.99999974E-6 : f32
      %35 = vector.broadcast %cst_23 : f32 to vector<8x1xf32>
      %36 = arith.addf %32, %35 : vector<8x1xf32>
      %37 = math.rsqrt %36 : vector<8x1xf32>
      %38 = vector.broadcast %37 : vector<8x1xf32> to vector<8x128xf32>
      %39 = arith.mulf %34, %38 : vector<8x128xf32>
      %c0_24 = arith.constant 0 : index
      %c0_25 = arith.constant 0 : index
      %40 = vector.load %arg6[%c0_24, %c0_25] : memref<1x128xf32, #tpu.memory_space<vmem>>, vector<1x128xf32>
      %41 = vector.broadcast %40 : vector<1x128xf32> to vector<8x128xf32>
      %42 = arith.mulf %39, %41 : vector<8x128xf32>
      %c0_26 = arith.constant 0 : index
      %c0_27 = arith.constant 0 : index
      %43 = vector.load %arg7[%c0_26, %c0_27] : memref<1x128xf32, #tpu.memory_space<vmem>>, vector<1x128xf32>
      %44 = vector.broadcast %43 : vector<1x128xf32> to vector<8x128xf32>
      %45 = arith.addf %42, %44 : vector<8x128xf32>
      %cst_28 = arith.constant 0.000000e+00 : f32
      %46 = vector.broadcast %cst_28 : f32 to vector<8x128xf32>
      %47 = arith.maximumf %45, %46 : vector<8x128xf32>
      %c0_29 = arith.constant 0 : index
      %c0_30 = arith.constant 0 : index
      %48 = vector.load %arg8[%c0_29, %c0_30] : memref<8x128xf32, #tpu.memory_space<vmem>>, vector<8x128xf32>
      tpu.vector_store %arg8[%c0_29, %c0_30], %47 {strides = array<i32>} : memref<8x128xf32, #tpu.memory_space<vmem>>, vector<8x128xf32>,
    } else {
    }
    return
  }
  func.func @transform_0(%arg0: i32, %arg1: i32) -> (i32, i32, i32) {
    %c0_i32 = arith.constant 0 : i32
    %c0_i32_0 = arith.constant 0 : i32
    return %arg0, %arg1, %c0_i32 : i32, i32, i32
  }
  func.func @transform_1(%arg0: i32, %arg1: i32) -> (i32, i32, i32) {
    %c0_i32 = arith.constant 0 : i32
    %c0_i32_0 = arith.constant 0 : i32
    %c0_i32_1 = arith.constant 0 : i32
    return %c0_i32, %arg1, %c0_i32_0 : i32, i32, i32
  }
  func.func @transform_2(%arg0: i32, %arg1: i32) -> (i32, i32) {
    %c0_i32 = arith.constant 0 : i32
    %c0_i32_0 = arith.constant 0 : i32
    %c0_i32_1 = arith.constant 0 : i32
    return %c0_i32, %c0_i32_0 : i32, i32
  }
  func.func @transform_3(%arg0: i32, %arg1: i32) -> (i32, i32) {
    %c0_i32 = arith.constant 0 : i32
    %c0_i32_0 = arith.constant 0 : i32
    %c0_i32_1 = arith.constant 0 : i32
    return %c0_i32, %c0_i32_0 : i32, i32
  }
  func.func @transform_4(%arg0: i32, %arg1: i32) -> (i32, i32) {
    %c0_i32 = arith.constant 0 : i32
    %c0_i32_0 = arith.constant 0 : i32
    %c0_i32_1 = arith.constant 0 : i32
    return %c0_i32, %c0_i32_0 : i32, i32
  }
  func.func @transform_5(%arg0: i32, %arg1: i32) -> (i32, i32) {
    %c0_i32 = arith.constant 0 : i32
    %c0_i32_0 = arith.constant 0 : i32
    %c0_i32_1 = arith.constant 0 : i32
    return %c0_i32, %c0_i32_0 : i32, i32
  }
  func.func @transform_6(%arg0: i32, %arg1: i32) -> (i32, i32) {
    %c0_i32 = arith.constant 0 : i32
    %c0_i32_0 = arith.constant 0 : i32
    return %arg0, %c0_i32 : i32, i32
  }
}

</mosaic_0001>

<llo_original>
// kernel: tpu_custom_call.1
$region0: #{tpu_custom_call.1}
  #allocation0 [shape = 'u32[]', space=smem, size = 0x4, offset = 0x4, fixed_abs, tag = 'smem constant byte address 0x4 - core index']
  #allocation1 [shape = 'u32[144,128]{1,0:T(1,128)}', space=vmem, size = 0x12000, scoped, tag = 'internal scratch']
  #allocation2 [shape = 'f32[8,128]{1,0:T(8,128)}', space=vmem, size = 0x1000, scoped, tag = 'scratch operand']
  %s0 = inlined_call_operand.hbm [shape: f32[8,8,128], index: 0, kind: input, shape index: {}]
  %s1 = inlined_call_operand.vmem [shape: f32[1,8,1], index: 1, kind: input, shape index: {}]
  %s2 = inlined_call_operand.hbm [shape: f32[128,128], index: 2, kind: input, shape index: {}]
  %s3 = inlined_call_operand.vmem [shape: f32[1,128], index: 3, kind: input, shape index: {}]
  %s4 = inlined_call_operand.vmem [shape: f32[1,128], index: 4, kind: input, shape index: {}]
  %s5 = inlined_call_operand.vmem [shape: f32[1,128], index: 5, kind: input, shape index: {}]
  %s6 = inlined_call_operand.hbm [shape: f32[8,128], index: 6, kind: output, shape index: {}]
  %s7 = sld [smem:[#allocation0]]
  $region50: #{tpu_custom_call.1} parent=0
    _
  %s9 = ssub.s32 1, %s7
  %s10 = scalar_select 0, %s9, %s7
  $region1: #{tpu_custom_call.1} parent=0
    #allocation3 [shape = 'u8[32768]{0}', space=vmem, size = 0x8000, scoped, tag = 'input window, operand 0, single buffered']
    #allocation4 [shape = 's32[1]{0}', space=sflag, size = 0x4, scoped, tag = 'scoped memory for tpu_custom_call.1']
    #allocation5 [shape = 's32[1]{0}', space=sflag, size = 0x4, scoped, tag = 'scoped memory for tpu_custom_call.1']
    #allocation6 [shape = 'u8[65536]{0}', space=vmem, size = 0x10000, scoped, tag = 'input window, operand 2, single buffered']
    #allocation7 [shape = 's32[1]{0}', space=sflag, size = 0x4, scoped, tag = 'scoped memory for tpu_custom_call.1']
    #allocation8 [shape = 'u8[4096]{0}', space=vmem, size = 0x1000, scoped, tag = 'output window, operand 0, single buffered']
    %11 = vsyncpa [#allocation4], 0
    %12 = vsyncpa [#allocation7], 0
    %13 = vsyncpa [#allocation5], 0
    // Predicated region
    $region2: #{tpu_custom_call.1} parent=1 // pred_check
      _
    $region3: #{tpu_custom_call.1} parent=1 // pred_check_branch
      %15 = sbr.rel (0) target = $region5
    $region4: #{tpu_custom_call.1} parent=1 // pred_region
      %s17 = ssub.s32 1024, 1024
      %18 = vsyncadd [#allocation4], %s17
      %s19 = sshll.u32 [#allocation3], 4
      %s20 = int_to_ptr.vmem [resolvable:$true] %s19
      %25 = dma.hbm_to_vmem [thread:$0]  %s0, 1024, %s20, [#allocation4], 128, 128, 8
    $region5: #{tpu_custom_call.1} parent=1 // pred_fallthru
      _
    // Predicated region
    $region6: #{tpu_custom_call.1} parent=1 // pred_check
      _
    $region7: #{tpu_custom_call.1} parent=1 // pred_check_branch
      %27 = sbr.rel (0) target = $region9
    $region8: #{tpu_custom_call.1} parent=1 // pred_region
      _
    $region9: #{tpu_custom_call.1} parent=1 // pred_fallthru
      _
    // Predicated region
    $region10: #{tpu_custom_call.1} parent=1 // pred_check
      _
    $region11: #{tpu_custom_call.1} parent=1 // pred_check_branch
      %29 = sbr.rel (0) target = $region13
    $region12: #{tpu_custom_call.1} parent=1 // pred_region
      %s31 = ssub.s32 2048, 2048
      %32 = vsyncadd [#allocation7], %s31
      %s33 = sshll.u32 [#allocation6], 4
      %s34 = int_to_ptr.vmem [resolvable:$true] %s33
      %39 = dma.hbm_to_vmem [thread:$0]  %s2, 2048, %s34, [#allocation7], 128, 128, 8
    $region13: #{tpu_custom_call.1} parent=1 // pred_fallthru
      _
    // Predicated region
    $region14: #{tpu_custom_call.1} parent=1 // pred_check
      _
    $region15: #{tpu_custom_call.1} parent=1 // pred_check_branch
      %41 = sbr.rel (0) target = $region17
    $region16: #{tpu_custom_call.1} parent=1 // pred_region
      _
    $region17: #{tpu_custom_call.1} parent=1 // pred_fallthru
      _
    // Predicated region
    $region18: #{tpu_custom_call.1} parent=1 // pred_check
      _
    $region19: #{tpu_custom_call.1} parent=1 // pred_check_branch
      %43 = sbr.rel (0) target = $region21
    $region20: #{tpu_custom_call.1} parent=1 // pred_region
      _
    $region21: #{tpu_custom_call.1} parent=1 // pred_fallthru
      _
    // Predicated region
    $region22: #{tpu_custom_call.1} parent=1 // pred_check
      _
    $region23: #{tpu_custom_call.1} parent=1 // pred_check_branch
      %45 = sbr.rel (0) target = $region25
    $region24: #{tpu_custom_call.1} parent=1 // pred_region
      _
    $region25: #{tpu_custom_call.1} parent=1 // pred_fallthru
      _
    // Predicated region
    $region26: #{tpu_custom_call.1} parent=1 // pred_check
      _
    $region27: #{tpu_custom_call.1} parent=1 // pred_check_branch
      %47 = sbr.rel (0) target = $region29
    $region28: #{tpu_custom_call.1} parent=1 // pred_region
      %48 = dma.done [#allocation4], 1024
    $region29: #{tpu_custom_call.1} parent=1 // pred_fallthru
      _
    // Predicated region
    $region30: #{tpu_custom_call.1} parent=1 // pred_check
      _
    $region31: #{tpu_custom_call.1} parent=1 // pred_check_branch
      %50 = sbr.rel (0) target = $region33
    $region32: #{tpu_custom_call.1} parent=1 // pred_region
      %51 = dma.done [#allocation7], 2048
    $region33: #{tpu_custom_call.1} parent=1 // pred_fallthru
      _
    %p52 = scmp.eq.s32.totalorder 0, 0
    // Predicated region
    $region34: #{tpu_custom_call.1} parent=1 // pred_check
      %p53 = pneg %p52
    $region35: #{tpu_custom_call.1} parent=1 // pred_check_branch
      %55 = sbr.rel (%p53) target = $region37
    $region36: #{tpu_custom_call.1} parent=1 // pred_region
      %56 = vst [vmem:[#allocation2] sm:$0xff] 0.0
    $region37: #{tpu_custom_call.1} parent=1 // pred_fallthru
      _
    %v57 = vld [vmem:[#allocation3] sm:$0xff]
    %v58 = vld [vmem:[#allocation3 + $0x8] sm:$0xff]
    %v59 = vld [vmem:[#allocation3 + $0x10] sm:$0xff]
    %v60 = vld [vmem:[#allocation3 + $0x18] sm:$0xff]
    %v61 = vld [vmem:[#allocation3 + $0x20] sm:$0xff]
    %v62 = vld [vmem:[#allocation3 + $0x28] sm:$0xff]
    %v63 = vld [vmem:[#allocation3 + $0x30] sm:$0xff]
    %v64 = vld [vmem:[#allocation3 + $0x38] sm:$0xff]
    %v65 = vld [vmem:[%s1] sm:$0xff]
    %67 = vset.pattern.permute.xlu0 0
    %68 = vperm.xlu0 %67, %v65
    %v69 = vpop.permute.xlu0 %68
    %v71 = vmul.f32 %v57, %v69
    %v72 = vmul.f32 %v58, %v69
    %v73 = vmul.f32 %v59, %v69
    %v74 = vmul.f32 %v60, %v69
    %v75 = vmul.f32 %v61, %v69
    %v76 = vmul.f32 %v62, %v69
    %v77 = vmul.f32 %v63, %v69
    %v78 = vmul.f32 %v64, %v69
    %v79 = vrot.slane %v71, 4
    %v80 = vadd.f32 %v71, %v79
    %v81 = vrot.slane %v80, 2
    %v82 = vadd.f32 %v80, %v81
    %v83 = vrot.slane %v82, 1
    %v84 = vadd.f32 %v82, %v83
    %v85 = vrot.slane %v72, 4
    %v86 = vadd.f32 %v72, %v85
    %v87 = vrot.slane %v86, 2
    %v88 = vadd.f32 %v86, %v87
    %v89 = vrot.slane %v88, 1
    %v90 = vadd.f32 %v88, %v89
    %v91 = vrot.slane %v73, 4
    %v92 = vadd.f32 %v73, %v91
    %v93 = vrot.slane %v92, 2
    %v94 = vadd.f32 %v92, %v93
    %v95 = vrot.slane %v94, 1
    %v96 = vadd.f32 %v94, %v95
    %v97 = vrot.slane %v74, 4
    %v98 = vadd.f32 %v74, %v97
    %v99 = vrot.slane %v98, 2
    %v100 = vadd.f32 %v98, %v99
    %v101 = vrot.slane %v100, 1
    %v102 = vadd.f32 %v100, %v101
    %v103 = vrot.slane %v75, 4
    %v104 = vadd.f32 %v75, %v103
    %v105 = vrot.slane %v104, 2
    %v106 = vadd.f32 %v104, %v105
    %v107 = vrot.slane %v106, 1
    %v108 = vadd.f32 %v106, %v107
    %v109 = vrot.slane %v76, 4
    %v110 = vadd.f32 %v76, %v109
    %v111 = vrot.slane %v110, 2
    %v112 = vadd.f32 %v110, %v111
    %v113 = vrot.slane %v112, 1
    %v114 = vadd.f32 %v112, %v113
    %v115 = vrot.slane %v77, 4
    %v116 = vadd.f32 %v77, %v115
    %v117 = vrot.slane %v116, 2
    %v118 = vadd.f32 %v116, %v117
    %v119 = vrot.slane %v118, 1
    %v120 = vadd.f32 %v118, %v119
    %v121 = vrot.slane %v78, 4
    %v122 = vadd.f32 %v78, %v121
    %v123 = vrot.slane %v122, 2
    %v124 = vadd.f32 %v122, %v123
    %v125 = vrot.slane %v124, 1
    %v126 = vadd.f32 %v124, %v125
    %v127 = vld [vmem:[#allocation2] sm:$0xff]
    %vm136 = vcmask 1041409
    %v137 = vsel %vm136, %v90, %v84
    %vm138 = vcmask 1042434
    %v139 = vsel %vm138, %v96, %v137
    %vm140 = vcmask 1043459
    %v141 = vsel %vm140, %v102, %v139
    %vm142 = vcmask 1044484
    %v143 = vsel %vm142, %v108, %v141
    %vm144 = vcmask 1045509
    %v145 = vsel %vm144, %v114, %v143
    %vm146 = vcmask 1046534
    %v147 = vsel %vm146, %v120, %v145
    %vm148 = vcmask 1047559
    %v149 = vsel %vm148, %v126, %v147
    %v151 = vadd.f32 %v127, %v149
    %152 = vst [vmem:[#allocation2] sm:$0xff] %v151
    // Predicated region
    $region38: #{tpu_custom_call.1} parent=1 // pred_check
      %p153 = pneg %p52
    $region39: #{tpu_custom_call.1} parent=1 // pred_check_branch
      %155 = sbr.rel (%p153) target = $region41
    $region40: #{tpu_custom_call.1} parent=1 // pred_region
      %v156 = vld [vmem:[#allocation2] sm:$0xff]
      %v157 = vld [vmem:[#allocation6] sm:$0xff]
      %v158 = vld [vmem:[#allocation6 + $0x8] sm:$0xff]
      %v159 = vld [vmem:[#allocation6 + $0x10] sm:$0xff]
      %v160 = vld [vmem:[#allocation6 + $0x18] sm:$0xff]
      %v161 = vld [vmem:[#allocation6 + $0x20] sm:$0xff]
      %v162 = vld [vmem:[#allocation6 + $0x28] sm:$0xff]
      %v163 = vld [vmem:[#allocation6 + $0x30] sm:$0xff]
      %v164 = vld [vmem:[#allocation6 + $0x38] sm:$0xff]
      %v165 = vld [vmem:[#allocation6 + $0x40] sm:$0xff]
      %v166 = vld [vmem:[#allocation6 + $0x48] sm:$0xff]
      %v167 = vld [vmem:[#allocation6 + $0x50] sm:$0xff]
      %v168 = vld [vmem:[#allocation6 + $0x58] sm:$0xff]
      %v169 = vld [vmem:[#allocation6 + $0x60] sm:$0xff]
      %v170 = vld [vmem:[#allocation6 + $0x68] sm:$0xff]
      %v171 = vld [vmem:[#allocation6 + $0x70] sm:$0xff]
      %v172 = vld [vmem:[#allocation6 + $0x78] sm:$0xff]
      %v173 = vld [vmem:[%s3] sm:$0x1]
      %v175 = vlaneseq
      %v176 = vshrl.u32 %v175, 7
      %v177 = vsub.s32 0, %v176
      %v178 = vrot.slane %v173, %v177
      %180 = vmatprep.subr.mxu0 0.0
      %181 = vmatpush1.msra.mxu0 %v157
      %182 = vmatprep.subr.mxu0 0.0
      %183 = vmatpush1.msra.mxu0 %v158
      %184 = vmatprep.subr.mxu0 0.0
      %185 = vmatpush1.msra.mxu0 %v159
      %186 = vmatprep.subr.mxu0 0.0
      %187 = vmatpush1.msra.mxu0 %v160
      %188 = vmatprep.subr.mxu0 0.0
      %189 = vmatpush1.msra.mxu0 %v161
      %190 = vmatprep.subr.mxu0 0.0
      %191 = vmatpush1.msra.mxu0 %v162
      %192 = vmatprep.subr.mxu0 0.0
      %193 = vmatpush1.msra.mxu0 %v163
      %194 = vmatprep.subr.mxu0 0.0
      %195 = vmatpush1.msra.mxu0 %v164
      %196 = vmatprep.subr.mxu0 0.0
      %197 = vmatpush1.msra.mxu0 %v165
      %198 = vmatprep.subr.mxu0 0.0
      %199 = vmatpush1.msra.mxu0 %v166
      %200 = vmatprep.subr.mxu0 0.0
      %201 = vmatpush1.msra.mxu0 %v167
      %202 = vmatprep.subr.mxu0 0.0
      %203 = vmatpush1.msra.mxu0 %v168
      %204 = vmatprep.subr.mxu0 0.0
      %205 = vmatpush1.msra.mxu0 %v169
      %206 = vmatprep.subr.mxu0 0.0
      %207 = vmatpush1.msra.mxu0 %v170
      %208 = vmatprep.subr.mxu0 0.0
      %209 = vmatpush1.msra.mxu0 %v171
      %210 = vmatprep.subr.mxu0 0.0
      %211 = vmatpush1.msra.mxu0 %v172
      %212 = vmatprep.subr.mxu0 0.0
      %213 = vmatpush1.msra.mxu0 0.0
      %214 = vmatprep.subr.mxu0 0.0
      %215 = vmatpush1.msra.mxu0 0.0
      %216 = vmatprep.subr.mxu0 0.0
      %217 = vmatpush1.msra.mxu0 0.0
      %218 = vmatprep.subr.mxu0 0.0
      %219 = vmatpush1.msra.mxu0 0.0
      %220 = vmatprep.subr.mxu0 0.0
      %221 = vmatpush1.msra.mxu0 0.0
      %222 = vmatprep.subr.mxu0 0.0
      %223 = vmatpush1.msra.mxu0 0.0
      %224 = vmatprep.subr.mxu0 0.0
      %225 = vmatpush1.msra.mxu0 0.0
      %226 = vmatprep.subr.mxu0 0.0
      %227 = vmatpush1.msra.mxu0 0.0
      %228 = vmatprep.subr.mxu0 0.0
      %229 = vmatpush1.msra.mxu0 0.0
      %230 = vmatprep.subr.mxu0 0.0
      %231 = vmatpush1.msra.mxu0 0.0
      %232 = vmatprep.subr.mxu0 0.0
      %233 = vmatpush1.msra.mxu0 0.0
      %234 = vmatprep.subr.mxu0 0.0
      %235 = vmatpush1.msra.mxu0 0.0
      %236 = vmatprep.subr.mxu0 0.0
      %237 = vmatpush1.msra.mxu0 0.0
      %238 = vmatprep.subr.mxu0 0.0
      %239 = vmatpush1.msra.mxu0 0.0
      %240 = vmatprep.subr.mxu0 0.0
      %241 = vmatpush1.msra.mxu0 0.0
      %242 = vmatprep.subr.mxu0 0.0
      %243 = vmatpush1.msra.mxu0 0.0
      %244 = vmatprep.mubr.f32.mxu0 0.0
      %245 = vmatmul.mubr.f32.gmra.mrb[0].mxu0 %v156
      %v246 = vpop.f32.mrb[0].mxu0
      %v247 = vadd.f32 %v178, %v246
      %v248 = vpop.f32.mrb[0].mxu0
      %249 = vdwg.mxu0
      %250 = vadd.xlane.f32.xlu0 %v247
      %v251 = vpop.xlane.xlu0 %250
      %v252 = vrcp.pop 128.0
      %v253 = vmul.f32 %v251, %v252
      %v254 = vsub.f32 %v247, %v253
      %v255 = vmul.f32 %v254, %v254
      %256 = vadd.xlane.f32.xlu0 %v255
      %v257 = vpop.xlane.xlu0 %256
      %v258 = vmul.f32 %v257, %v252
      %v259 = vadd.f32 %v258, 1e-05
      %v260 = vrsqrt.pop %v259
      %v261 = vmul.f32 %v254, %v260
      %v262 = vld [vmem:[%s4] sm:$0x1]
      %v264 = vlaneseq
      %v265 = vshrl.u32 %v264, 7
      %v266 = vsub.s32 0, %v265
      %v267 = vrot.slane %v262, %v266
      %v269 = vmul.f32 %v261, %v267
      %v270 = vld [vmem:[%s5] sm:$0x1]
      %v272 = vlaneseq
      %v273 = vshrl.u32 %v272, 7
      %v274 = vsub.s32 0, %v273
      %v275 = vrot.slane %v270, %v274
      %v277 = vadd.f32 %v269, %v275
      %v278 = vmax.f32 %v277, 0.0
      %279 = vst [vmem:[#allocation8] sm:$0xff] %v278
    $region41: #{tpu_custom_call.1} parent=1 // pred_fallthru
      _
    // Predicated region
    $region42: #{tpu_custom_call.1} parent=1 // pred_check
      _
    $region43: #{tpu_custom_call.1} parent=1 // pred_check_branch
      %281 = sbr.rel (0) target = $region45
    $region44: #{tpu_custom_call.1} parent=1 // pred_region
      %s283 = ssub.s32 128, 128
      %284 = vsyncadd [#allocation5], %s283
      %s286 = sshll.u32 [#allocation8], 4
      %s287 = int_to_ptr.vmem [resolvable:$true] %s286
      %289 = dma.vmem_to_hbm [thread:$0]  %s287, 128, %s6, [#allocation5]
    $region45: #{tpu_custom_call.1} parent=1 // pred_fallthru
      _
    // Predicated region
    $region46: #{tpu_custom_call.1} parent=1 // pred_check
      _
    $region47: #{tpu_custom_call.1} parent=1 // pred_check_branch
      %291 = sbr.rel (0) target = $region49
    $region48: #{tpu_custom_call.1} parent=1 // pred_region
      %292 = dma.done [#allocation5], 128
    $region49: #{tpu_custom_call.1} parent=1 // pred_fallthru
      _
    %293 = vsyncpa [#allocation4], 1
    %294 = vsyncpa [#allocation7], 1
    %295 = vsyncpa [#allocation5], 1

</llo_original>
